<compile_context>
chip_gen: v7x
topology: tpu7x:2x2x1
jax: 0.10.0
libtpu: 0.0.40
codegen_flags: <defaults>
</compile_context>

<pallas_src>
import jax
import jax.numpy as jnp
from jax.experimental import pallas as pl
from jax.experimental.pallas import tpu as pltpu


def mlp_kernel(x_ref, w1_ref, b1_ref, w2_ref, b2_ref, o_ref):
    # x: (TILE_B, 128) f32, w1: (128, 32) f32, b1: (1, 32) f32,
    # w2: (32, 6) f32, b2: (1, 6) f32, o: (TILE_B, 6) f32
    x_bf = x_ref[...].astype(jnp.bfloat16)            # cast in-kernel (free; mem-bound on x read)
    w1_bf = w1_ref[...].astype(jnp.bfloat16)
    h = jnp.dot(x_bf, w1_bf, preferred_element_type=jnp.float32)
    h = jnp.maximum(h + b1_ref[...], 0.0)             # bias + ReLU on f32 accumulator
    # Tiny second matmul stays f32 (negligible cost, closer to PyTorch math).
    out = jnp.dot(h, w2_ref[...], preferred_element_type=jnp.float32)
    o_ref[...] = out + b2_ref[...]


def classification_model(x, w1, b1, w2, b2, tile_b=4096):
    """x: (B, 128) f32. Returns (B, 6) f32 = fc2(relu(fc1(x)))."""
    B, in_dim = x.shape
    hid_dim = w1.shape[1]
    out_dim = w2.shape[1]

    # Big tiles amortize the ~0.35 us per-grid-step overhead; clamp down for
    # tiny batches while keeping TILE_B a multiple of 8 sublanes.
    tile_b = min(tile_b, max(8, ((B + 7) // 8) * 8))
    n_tiles = pl.cdiv(B, tile_b)                       # ragged last block handled by Pallas

    b1_f32 = b1.astype(jnp.float32)
    b2_f32 = b2.astype(jnp.float32)

    flops = 2 * B * (in_dim * hid_dim + hid_dim * out_dim)
    bytes_accessed = (x.size * x.dtype.itemsize
                      + w1.size * 4 + w2.size * 4
                      + b1_f32.size * 4 + b2_f32.size * 4
                      + B * out_dim * 4)

    out = pl.pallas_call(
        mlp_kernel,
        out_shape=jax.ShapeDtypeStruct((B, out_dim), jnp.float32),
        grid=(n_tiles,),
        in_specs=[
            pl.BlockSpec((tile_b, in_dim), lambda i: (i, 0)),     # x tile (pipelined)
            pl.BlockSpec((in_dim, hid_dim), lambda i: (0, 0)),    # w1 (VMEM-resident)
            pl.BlockSpec((1, hid_dim), lambda i: (0, 0)),         # b1
            pl.BlockSpec((hid_dim, out_dim), lambda i: (0, 0)),   # w2
            pl.BlockSpec((1, out_dim), lambda i: (0, 0)),         # b2
        ],
        out_specs=pl.BlockSpec((tile_b, out_dim), lambda i: (i, 0)),
        compiler_params=pltpu.CompilerParams(
            dimension_semantics=("parallel",)),
        cost_estimate=pl.CostEstimate(
            flops=flops, transcendentals=0, bytes_accessed=bytes_accessed),
    )(x, w1, b1_f32, w2, b2_f32)

    return out


def init_params(key):
    # Deterministic init mimicking nn.Linear's U(-1/sqrt(fan_in), 1/sqrt(fan_in)).
    k1, k2, k3, k4 = jax.random.split(key, 4)
    bound1 = 1.0 / jnp.sqrt(128.0)
    bound2 = 1.0 / jnp.sqrt(32.0)
    w1 = jax.random.uniform(k1, (128, 32), jnp.float32, -bound1, bound1)
    b1 = jax.random.uniform(k2, (1, 32), jnp.float32, -bound1, bound1)
    w2 = jax.random.uniform(k3, (32, 6), jnp.float32, -bound2, bound2)
    b2 = jax.random.uniform(k4, (1, 6), jnp.float32, -bound2, bound2)
    return w1, b1, w2, b2


if __name__ == "__main__":
    key = jax.random.PRNGKey(0)
    k_x, k_p = jax.random.split(key)
    B = 2
    x = jax.random.normal(k_x, (B, 128), jnp.float32)
    w1, b1, w2, b2 = init_params(k_p)

    out = classification_model(x, w1, b1, w2, b2)
    out = jax.block_until_ready(out)
    assert out.shape == (B, 6)

    # Reference mirroring the kernel's math (bf16 first matmul, f32 second).
    xb = x.astype(jnp.bfloat16).astype(jnp.float32)
    w1b = w1.astype(jnp.bfloat16).astype(jnp.float32)
    h = jnp.maximum(xb @ w1b + b1, 0.0)
    ref = h @ w2 + b2
    assert jnp.allclose(out, ref, atol=1e-3, rtol=1e-3), (
        f"max abs err {jnp.max(jnp.abs(out - ref))}")

    # Loose sanity check against the pure-f32 PyTorch-equivalent forward.
    ref_f32 = jnp.maximum(x @ w1 + b1, 0.0) @ w2 + b2
    assert jnp.allclose(out, ref_f32, atol=5e-2, rtol=5e-2)

    print("KERNEL_OK")
</pallas_src>

<mosaic_0001>
module attributes {stable_mosaic.version = 11 : i64} {
  func.func @mlp_kernel(%arg0: i32, %arg1: memref<8x128xf32, #tpu.memory_space<vmem>>, %arg2: memref<128x32xf32, #tpu.memory_space<vmem>>, %arg3: memref<1x32xf32, #tpu.memory_space<vmem>>, %arg4: memref<32x6xf32, #tpu.memory_space<vmem>>, %arg5: memref<1x6xf32, #tpu.memory_space<vmem>>, %arg6: memref<8x6xf32, #tpu.memory_space<vmem>>) attributes {dimension_semantics = [#tpu.dimension_semantics<parallel>], iteration_bounds = array<i64: 1>, scalar_prefetch = 0 : i64, scratch_operands = 0 : i64, tpu.core_type = #tpu.core_type<tc>, window_params = [{transform_indices = @transform_0, window_bounds = array<i64: 8, 128>}, {pipeline_mode = #tpu.pipeline_mode<synchronous>, transform_indices = @transform_1, window_bounds = array<i64: 128, 32>}, {pipeline_mode = #tpu.pipeline_mode<synchronous>, transform_indices = @transform_2, window_bounds = array<i64: 1, 32>}, {pipeline_mode = #tpu.pipeline_mode<synchronous>, transform_indices = @transform_3, window_bounds = array<i64: 32, 6>}, {pipeline_mode = #tpu.pipeline_mode<synchronous>, transform_indices = @transform_4, window_bounds = array<i64: 1, 6>}, {transform_indices = @transform_5, window_bounds = array<i64: 8, 6>}]} {
    %c0 = arith.constant 0 : index
    %c0_0 = arith.constant 0 : index
    %0 = vector.load %arg1[%c0, %c0_0] : memref<8x128xf32, #tpu.memory_space<vmem>>, vector<8x128xf32>
    %1 = arith.truncf %0 : vector<8x128xf32> to vector<8x128xbf16>
    %c0_1 = arith.constant 0 : index
    %c0_2 = arith.constant 0 : index
    %2 = vector.load %arg2[%c0_1, %c0_2] : memref<128x32xf32, #tpu.memory_space<vmem>>, vector<128x32xf32>
    %3 = arith.truncf %2 : vector<128x32xf32> to vector<128x32xbf16>
    %cst = arith.constant dense<0.000000e+00> : vector<8x32xf32>
    %4 = tpu.matmul %1, %3, %cst {dimension_numbers = #tpu.dot_dimension_numbers<[1], [0], [0], [1], [0, 0, 1, 1], [], []>} : vector<8x128xbf16>, vector<128x32xbf16>, vector<8x32xf32> -> vector<8x32xf32>
    %c0_3 = arith.constant 0 : index
    %c0_4 = arith.constant 0 : index
    %5 = vector.load %arg3[%c0_3, %c0_4] : memref<1x32xf32, #tpu.memory_space<vmem>>, vector<1x32xf32>
    %6 = vector.broadcast %5 : vector<1x32xf32> to vector<8x32xf32>
    %7 = arith.addf %4, %6 : vector<8x32xf32>
    %cst_5 = arith.constant 0.000000e+00 : f32
    %8 = vector.broadcast %cst_5 : f32 to vector<8x32xf32>
    %9 = arith.maximumf %7, %8 : vector<8x32xf32>
    %c0_6 = arith.constant 0 : index
    %c0_7 = arith.constant 0 : index
    %10 = vector.load %arg4[%c0_6, %c0_7] : memref<32x6xf32, #tpu.memory_space<vmem>>, vector<32x6xf32>
    %cst_8 = arith.constant dense<0.000000e+00> : vector<8x6xf32>
    %11 = tpu.matmul %9, %10, %cst_8 {dimension_numbers = #tpu.dot_dimension_numbers<[1], [0], [0], [1], [0, 0, 1, 1], [], []>} : vector<8x32xf32>, vector<32x6xf32>, vector<8x6xf32> -> vector<8x6xf32>
    %c0_9 = arith.constant 0 : index
    %c0_10 = arith.constant 0 : index
    %12 = vector.load %arg5[%c0_9, %c0_10] : memref<1x6xf32, #tpu.memory_space<vmem>>, vector<1x6xf32>
    %13 = vector.broadcast %12 : vector<1x6xf32> to vector<8x6xf32>
    %14 = arith.addf %11, %13 : vector<8x6xf32>
    %c0_11 = arith.constant 0 : index
    %c0_12 = arith.constant 0 : index
    %15 = vector.load %arg6[%c0_11, %c0_12] : memref<8x6xf32, #tpu.memory_space<vmem>>, vector<8x6xf32>
    tpu.vector_store %arg6[%c0_11, %c0_12], %14 {strides = array<i32>} : memref<8x6xf32, #tpu.memory_space<vmem>>, vector<8x6xf32>,
    return
  }
  func.func @transform_0(%arg0: i32) -> (i32, i32) {
    %c0_i32 = arith.constant 0 : i32
    %c0_i32_0 = arith.constant 0 : i32
    return %arg0, %c0_i32 : i32, i32
  }
  func.func @transform_1(%arg0: i32) -> (i32, i32) {
    %c0_i32 = arith.constant 0 : i32
    %c0_i32_0 = arith.constant 0 : i32
    %c0_i32_1 = arith.constant 0 : i32
    return %c0_i32, %c0_i32_0 : i32, i32
  }
  func.func @transform_2(%arg0: i32) -> (i32, i32) {
    %c0_i32 = arith.constant 0 : i32
    %c0_i32_0 = arith.constant 0 : i32
    %c0_i32_1 = arith.constant 0 : i32
    return %c0_i32, %c0_i32_0 : i32, i32
  }
  func.func @transform_3(%arg0: i32) -> (i32, i32) {
    %c0_i32 = arith.constant 0 : i32
    %c0_i32_0 = arith.constant 0 : i32
    %c0_i32_1 = arith.constant 0 : i32
    return %c0_i32, %c0_i32_0 : i32, i32
  }
  func.func @transform_4(%arg0: i32) -> (i32, i32) {
    %c0_i32 = arith.constant 0 : i32
    %c0_i32_0 = arith.constant 0 : i32
    %c0_i32_1 = arith.constant 0 : i32
    return %c0_i32, %c0_i32_0 : i32, i32
  }
  func.func @transform_5(%arg0: i32) -> (i32, i32) {
    %c0_i32 = arith.constant 0 : i32
    %c0_i32_0 = arith.constant 0 : i32
    return %arg0, %c0_i32 : i32, i32
  }
}

</mosaic_0001>

<llo_original>
// kernel: tpu_custom_call.1
$region0: #{tpu_custom_call.1}
  #allocation0 [shape = 'u32[]', space=smem, size = 0x4, offset = 0x4, fixed_abs, tag = 'smem constant byte address 0x4 - core index']
  #allocation1 [shape = 'u32[144,128]{1,0:T(1,128)}', space=vmem, size = 0x12000, scoped, tag = 'internal scratch']
  %s0 = inlined_call_operand.vmem [shape: f32[2,128], index: 0, kind: input, shape index: {}]
  %s1 = inlined_call_operand.vmem [shape: f32[128,32], index: 1, kind: input, shape index: {}]
  %s2 = inlined_call_operand.vmem [shape: f32[1,32], index: 2, kind: input, shape index: {}]
  %s3 = inlined_call_operand.vmem [shape: f32[32,6], index: 3, kind: input, shape index: {}]
  %s4 = inlined_call_operand.vmem [shape: f32[1,6], index: 4, kind: input, shape index: {}]
  %s5 = inlined_call_operand.hbm [shape: f32[2,6], index: 5, kind: output, shape index: {}]
  %s6 = sld [smem:[#allocation0]]
  $region30: #{tpu_custom_call.1} parent=0
    _
  %s8 = ssub.s32 1, %s6
  %s9 = scalar_select 0, %s8, %s6
  $region1: #{tpu_custom_call.1} parent=0
    #allocation2 [shape = 'u8[4096]{0}', space=vmem, size = 0x1000, scoped, tag = 'output window, operand 0, single buffered']
    #allocation3 [shape = 's32[1]{0}', space=sflag, size = 0x4, scoped, tag = 'scoped memory for tpu_custom_call.1']
    %10 = vsyncpa [#allocation3], 0
    // Predicated region
    $region2: #{tpu_custom_call.1} parent=1 // pred_check
      _
    $region3: #{tpu_custom_call.1} parent=1 // pred_check_branch
      %12 = sbr.rel (0) target = $region5
    $region4: #{tpu_custom_call.1} parent=1 // pred_region
      _
    $region5: #{tpu_custom_call.1} parent=1 // pred_fallthru
      _
    // Predicated region
    $region6: #{tpu_custom_call.1} parent=1 // pred_check
      _
    $region7: #{tpu_custom_call.1} parent=1 // pred_check_branch
      %14 = sbr.rel (0) target = $region9
    $region8: #{tpu_custom_call.1} parent=1 // pred_region
      _
    $region9: #{tpu_custom_call.1} parent=1 // pred_fallthru
      _
    // Predicated region
    $region10: #{tpu_custom_call.1} parent=1 // pred_check
      _
    $region11: #{tpu_custom_call.1} parent=1 // pred_check_branch
      %16 = sbr.rel (0) target = $region13
    $region12: #{tpu_custom_call.1} parent=1 // pred_region
      _
    $region13: #{tpu_custom_call.1} parent=1 // pred_fallthru
      _
    // Predicated region
    $region14: #{tpu_custom_call.1} parent=1 // pred_check
      _
    $region15: #{tpu_custom_call.1} parent=1 // pred_check_branch
      %18 = sbr.rel (0) target = $region17
    $region16: #{tpu_custom_call.1} parent=1 // pred_region
      _
    $region17: #{tpu_custom_call.1} parent=1 // pred_fallthru
      _
    // Predicated region
    $region18: #{tpu_custom_call.1} parent=1 // pred_check
      _
    $region19: #{tpu_custom_call.1} parent=1 // pred_check_branch
      %20 = sbr.rel (0) target = $region21
    $region20: #{tpu_custom_call.1} parent=1 // pred_region
      _
    $region21: #{tpu_custom_call.1} parent=1 // pred_fallthru
      _
    %v22 = vld [vmem:[%s0] sm:$0xff]
    %v23 = vpack.c.bf16 %v22, %v22
    %v24 = vld [vmem:[%s1] sm:$0xff]
    %v25 = vld [vmem:[%s1 + $0x8] sm:$0xff]
    %v26 = vld [vmem:[%s1 + $0x10] sm:$0xff]
    %v27 = vld [vmem:[%s1 + $0x18] sm:$0xff]
    %v28 = vld [vmem:[%s1 + $0x20] sm:$0xff]
    %v29 = vld [vmem:[%s1 + $0x28] sm:$0xff]
    %v30 = vld [vmem:[%s1 + $0x30] sm:$0xff]
    %v31 = vld [vmem:[%s1 + $0x38] sm:$0xff]
    %v32 = vld [vmem:[%s1 + $0x40] sm:$0xff]
    %v33 = vld [vmem:[%s1 + $0x48] sm:$0xff]
    %v34 = vld [vmem:[%s1 + $0x50] sm:$0xff]
    %v35 = vld [vmem:[%s1 + $0x58] sm:$0xff]
    %v36 = vld [vmem:[%s1 + $0x60] sm:$0xff]
    %v37 = vld [vmem:[%s1 + $0x68] sm:$0xff]
    %v38 = vld [vmem:[%s1 + $0x70] sm:$0xff]
    %v39 = vld [vmem:[%s1 + $0x78] sm:$0xff]
    %v40 = vpack.c.bf16 %v25, %v24
    %v41 = vpack.c.bf16 %v27, %v26
    %v42 = vpack.c.bf16 %v29, %v28
    %v43 = vpack.c.bf16 %v31, %v30
    %v44 = vpack.c.bf16 %v33, %v32
    %v45 = vpack.c.bf16 %v35, %v34
    %v46 = vpack.c.bf16 %v37, %v36
    %v47 = vpack.c.bf16 %v39, %v38
    %v48 = vld [vmem:[%s2] sm:$0x1]
    %v50 = vlaneseq
    %v51 = vshrl.u32 %v50, 7
    %v52 = vsub.s32 0, %v51
    %v53 = vrot.slane %v48, %v52
    %55 = vmatprep.subr.bf16.mxu0 0
    %56 = vmatpush1.bf16.msra.mxu0 %v40
    %57 = vmatprep.subr.bf16.mxu0 0
    %58 = vmatpush1.bf16.msra.mxu0 %v41
    %59 = vmatprep.subr.bf16.mxu0 0
    %60 = vmatpush1.bf16.msra.mxu0 %v42
    %61 = vmatprep.subr.bf16.mxu0 0
    %62 = vmatpush1.bf16.msra.mxu0 %v43
    %63 = vmatprep.subr.bf16.mxu0 0
    %64 = vmatpush1.bf16.msra.mxu0 %v44
    %65 = vmatprep.subr.bf16.mxu0 0
    %66 = vmatpush1.bf16.msra.mxu0 %v45
    %67 = vmatprep.subr.bf16.mxu0 0
    %68 = vmatpush1.bf16.msra.mxu0 %v46
    %69 = vmatprep.subr.bf16.mxu0 0
    %70 = vmatpush1.bf16.msra.mxu0 %v47
    %71 = vmatprep.subr.bf16.mxu0 0
    %72 = vmatpush1.bf16.msra.mxu0 0
    %73 = vmatprep.subr.bf16.mxu0 0
    %74 = vmatpush1.bf16.msra.mxu0 0
    %75 = vmatprep.subr.bf16.mxu0 0
    %76 = vmatpush1.bf16.msra.mxu0 0
    %77 = vmatprep.subr.bf16.mxu0 0
    %78 = vmatpush1.bf16.msra.mxu0 0
    %79 = vmatprep.subr.bf16.mxu0 0
    %80 = vmatpush1.bf16.msra.mxu0 0
    %81 = vmatprep.subr.bf16.mxu0 0
    %82 = vmatpush1.bf16.msra.mxu0 0
    %83 = vmatprep.subr.bf16.mxu0 0
    %84 = vmatpush1.bf16.msra.mxu0 0
    %85 = vmatprep.subr.bf16.mxu0 0
    %86 = vmatpush1.bf16.msra.mxu0 0
    %87 = vmatprep.mubr.bf16.mxu0 0
    %88 = vmatmul.mubr.bf16.gmra.mrb[0].mxu0 %v23
    %v89 = vpop.f32.mrb[0].mxu0
    %v90 = vadd.f32 %v53, %v89
    %v91 = vpop.f32.mrb[0].mxu0
    %v92 = vpop.f32.mrb[0].mxu0
    %v93 = vpop.f32.mrb[0].mxu0
    %94 = vdwg.mxu0
    %v95 = vmax.f32 %v90, 0.0
    %v96 = vld [vmem:[%s3] sm:$0xff]
    %v97 = vld [vmem:[%s3 + $0x8] sm:$0xff]
    %v98 = vld [vmem:[%s3 + $0x10] sm:$0xff]
    %v99 = vld [vmem:[%s3 + $0x18] sm:$0xff]
    %v100 = vld [vmem:[%s4] sm:$0x1]
    %v102 = vlaneseq
    %v103 = vshrl.u32 %v102, 7
    %v104 = vsub.s32 0, %v103
    %v105 = vrot.slane %v100, %v104
    %vm107 = vcmask 261120
    %v109 = vsel %vm107, %v95, 0
    %111 = vmatprep.subr.mxu0 0.0
    %112 = vmatpush1.msra.mxu0 %v96
    %113 = vmatprep.subr.mxu0 0.0
    %114 = vmatpush1.msra.mxu0 %v97
    %115 = vmatprep.subr.mxu0 0.0
    %116 = vmatpush1.msra.mxu0 %v98
    %117 = vmatprep.subr.mxu0 0.0
    %118 = vmatpush1.msra.mxu0 %v99
    %119 = vmatprep.subr.mxu0 0.0
    %120 = vmatpush1.msra.mxu0 0.0
    %121 = vmatprep.subr.mxu0 0.0
    %122 = vmatpush1.msra.mxu0 0.0
    %123 = vmatprep.subr.mxu0 0.0
    %124 = vmatpush1.msra.mxu0 0.0
    %125 = vmatprep.subr.mxu0 0.0
    %126 = vmatpush1.msra.mxu0 0.0
    %127 = vmatprep.subr.mxu0 0.0
    %128 = vmatpush1.msra.mxu0 0.0
    %129 = vmatprep.subr.mxu0 0.0
    %130 = vmatpush1.msra.mxu0 0.0
    %131 = vmatprep.subr.mxu0 0.0
    %132 = vmatpush1.msra.mxu0 0.0
    %133 = vmatprep.subr.mxu0 0.0
    %134 = vmatpush1.msra.mxu0 0.0
    %135 = vmatprep.subr.mxu0 0.0
    %136 = vmatpush1.msra.mxu0 0.0
    %137 = vmatprep.subr.mxu0 0.0
    %138 = vmatpush1.msra.mxu0 0.0
    %139 = vmatprep.subr.mxu0 0.0
    %140 = vmatpush1.msra.mxu0 0.0
    %141 = vmatprep.subr.mxu0 0.0
    %142 = vmatpush1.msra.mxu0 0.0
    %143 = vmatprep.subr.mxu0 0.0
    %144 = vmatpush1.msra.mxu0 0.0
    %145 = vmatprep.subr.mxu0 0.0
    %146 = vmatpush1.msra.mxu0 0.0
    %147 = vmatprep.subr.mxu0 0.0
    %148 = vmatpush1.msra.mxu0 0.0
    %149 = vmatprep.subr.mxu0 0.0
    %150 = vmatpush1.msra.mxu0 0.0
    %151 = vmatprep.subr.mxu0 0.0
    %152 = vmatpush1.msra.mxu0 0.0
    %153 = vmatprep.subr.mxu0 0.0
    %154 = vmatpush1.msra.mxu0 0.0
    %155 = vmatprep.subr.mxu0 0.0
    %156 = vmatpush1.msra.mxu0 0.0
    %157 = vmatprep.subr.mxu0 0.0
    %158 = vmatpush1.msra.mxu0 0.0
    %159 = vmatprep.subr.mxu0 0.0
    %160 = vmatpush1.msra.mxu0 0.0
    %161 = vmatprep.subr.mxu0 0.0
    %162 = vmatpush1.msra.mxu0 0.0
    %163 = vmatprep.subr.mxu0 0.0
    %164 = vmatpush1.msra.mxu0 0.0
    %165 = vmatprep.subr.mxu0 0.0
    %166 = vmatpush1.msra.mxu0 0.0
    %167 = vmatprep.subr.mxu0 0.0
    %168 = vmatpush1.msra.mxu0 0.0
    %169 = vmatprep.subr.mxu0 0.0
    %170 = vmatpush1.msra.mxu0 0.0
    %171 = vmatprep.subr.mxu0 0.0
    %172 = vmatpush1.msra.mxu0 0.0
    %173 = vmatprep.subr.mxu0 0.0
    %174 = vmatpush1.msra.mxu0 0.0
    %175 = vmatprep.mubr.f32.mxu0 0.0
    %176 = vmatmul.mubr.f32.gmra.mrb[0].mxu0 %v109
    %v177 = vpop.f32.mrb[0].mxu0
    %v178 = vadd.f32 %v105, %v177
    %v179 = vpop.f32.mrb[0].mxu0
    %180 = vdwg.mxu0
    %vm181 = vcmask 48128
    %182 = vst.msk [vmem:[#allocation2] sm:$0xff] %vm181, %v178
    // Predicated region
    $region22: #{tpu_custom_call.1} parent=1 // pred_check
      _
    $region23: #{tpu_custom_call.1} parent=1 // pred_check_branch
      %184 = sbr.rel (0) target = $region25
    $region24: #{tpu_custom_call.1} parent=1 // pred_region
      %s186 = ssub.s32 128, 32
      %187 = vsyncadd [#allocation3], %s186
      %s188 = sshll.u32 [#allocation2], 4
      %s189 = int_to_ptr.vmem [resolvable:$true] %s188
      %194 = dma.vmem_to_hbm [thread:$0]  %s189, 32, %s5, [#allocation3], 32, 32, 2
    $region25: #{tpu_custom_call.1} parent=1 // pred_fallthru
      _
    // Predicated region
    $region26: #{tpu_custom_call.1} parent=1 // pred_check
      _
    $region27: #{tpu_custom_call.1} parent=1 // pred_check_branch
      %196 = sbr.rel (0) target = $region29
    $region28: #{tpu_custom_call.1} parent=1 // pred_region
      %197 = dma.done [#allocation3], 128
    $region29: #{tpu_custom_call.1} parent=1 // pred_fallthru
      _
    %198 = vsyncpa [#allocation3], 1

</llo_original>
